<compile_context>
chip_gen: v7x
topology: tpu7x:2x2x1
jax: 0.10.0
libtpu: 0.0.40
codegen_flags: <defaults>
</compile_context>

<pallas_src>
import functools

import jax
import jax.numpy as jnp
from jax.experimental import pallas as pl
from jax.experimental.pallas import tpu as pltpu


def _ln_cfirst_kernel(x_ref, w_ref, b_ref, o_ref, *, eps, inv_c, epilogue_dtype):
    # x_ref/o_ref: (C, T) block (batch dim squeezed); w_ref/b_ref: (C, 1), resident.
    x = x_ref[...].astype(jnp.float32)                        # (C, T)

    # Two-pass moments over the channel axis, f32 accumulation (tile is in
    # VMEM, so the second pass is free of HBM traffic).
    mean = jnp.sum(x, axis=0, keepdims=True) * inv_c          # (1, T)
    xc = x - mean                                             # (C, T)
    var = jnp.sum(xc * xc, axis=0, keepdims=True) * inv_c     # (1, T), >= 0
    inv = jax.lax.rsqrt(var + eps)                            # (1, T)

    if epilogue_dtype == jnp.float32:
        w = w_ref[...].astype(jnp.float32)
        b = b_ref[...].astype(jnp.float32)
        o_ref[...] = (w * (xc * inv) + b).astype(o_ref.dtype)
    else:
        # bf16 epilogue (v6e/v7x only): halves VALU work and f32 temp footprint.
        xc_e = xc.astype(epilogue_dtype)
        inv_e = inv.astype(epilogue_dtype)
        w = w_ref[...].astype(epilogue_dtype)
        b = b_ref[...].astype(epilogue_dtype)
        o_ref[...] = (w * (xc_e * inv_e) + b).astype(o_ref.dtype)


def _vmem_capacity_bytes():
    try:
        return int(pltpu.get_tpu_info().vmem_capacity_bytes)
    except Exception:
        return 128 << 20  # conservative default (v5e/v6e class)


def _bf16_vpu_ok():
    """Best-effort: v5e has no bf16 VPU; v6e/v7x do. Default False if unknown."""
    try:
        info = pltpu.get_tpu_info()
        tag = (str(getattr(info, "chip_version", "")) +
               str(getattr(info, "chip_name", ""))).lower()
        if not tag:
            return False
        return not any(t in tag for t in ("v5e", "v5lite", "5lite", "v5_lite"))
    except Exception:
        return False


def _divisor_tiles(hw):
    """Multiples of 128 that divide hw, descending."""
    cands = []
    t = 128
    while t <= hw:
        if hw % t == 0:
            cands.append(t)
        t += 128
    return sorted(cands, reverse=True)


def _pick_spatial_tile(hw, c, itemsize, n_batch):
    """Returns (T, vmem_limit_bytes). T is lane-dense (multiple of 128 or full
    hw), sized against a generation/dtype-aware VMEM budget, preferring a
    divisor of hw (no ragged tile), and split enough to feed both v7x cores."""
    cap = _vmem_capacity_bytes()

    if cap <= (64 << 20):
        # v7x-class part: 64 MiB VMEM/TC. Leave headroom for the in-kernel f32
        # temps (x, xc ~ 2 * C*T*4 bytes) and for double-buffered in+out tiles.
        per_buffer = (3 << 20) if itemsize < 4 else (6 << 20)
        vmem_limit = 42 << 20
    else:
        # v5e / v6e: 128 MiB physical VMEM. Larger tiles cut per-step overhead;
        # explicit limit also overrides v5e's 16 MiB scoped default.
        per_buffer = 8 << 20
        vmem_limit = 64 << 20

    bytes_per_col = c * itemsize  # one (C, 1) lane column of the tile
    if bytes_per_col * 128 > per_buffer:
        # TODO(synk): add a C-tiled fallback (grid axis over C, s1/s2 VMEM
        # accumulators, finalize under pl.when) for very-large-channel models.
        raise ValueError(
            f"C={c} too large for a single (C, 128) VMEM tile under the "
            f"{per_buffer >> 20} MiB per-buffer budget; needs a C-tiled kernel.")

    max_elems = max(128, per_buffer // bytes_per_col)

    if hw <= max_elems:
        t = hw  # full spatial extent: always legal, always lane-dense
    else:
        divs = [d for d in _divisor_tiles(hw) if d <= max_elems]
        t = divs[0] if divs else max(128, (max_elems // 128) * 128)

    # Megacore: ensure >= 4 grid steps so both v7x TensorCores (and their DMA
    # queues) get work on small-batch shapes. No-op when t is already 128.
    def n_blocks(tt):
        return n_batch * -(-hw // tt)

    while n_blocks(t) < 4 and t > 128:
        divs = [d for d in _divisor_tiles(hw) if d < t]
        smaller = divs[0] if divs else max(128, ((t // 2) // 128) * 128)
        if smaller >= t:
            break
        t = smaller

    return int(t), int(vmem_limit)


def layer_norm_channels_first(x, weight, bias, eps=1e-6, spatial_tile=None):
    """x: (N, C, H, W); weight, bias: (C,). Returns (N, C, H, W)."""
    N, C, H, W = x.shape
    HW = H * W

    # Contiguous reshape: NCHW -> (N, C, H*W). No transpose, no HBM copy.
    x3 = x.reshape(N, C, HW)
    w2 = weight.reshape(C, 1)
    b2 = bias.reshape(C, 1)

    itemsize = jnp.dtype(x.dtype).itemsize
    if spatial_tile is None:
        T, vmem_limit = _pick_spatial_tile(HW, C, itemsize, N)
    else:
        T = int(spatial_tile)
        _, vmem_limit = _pick_spatial_tile(HW, C, itemsize, N)

    epilogue_dtype = jnp.float32
    if x.dtype == jnp.bfloat16 and _bf16_vpu_ok():
        epilogue_dtype = jnp.bfloat16

    grid = (N, pl.cdiv(HW, T))
    kernel = functools.partial(
        _ln_cfirst_kernel, eps=float(eps), inv_c=1.0 / C,
        epilogue_dtype=epilogue_dtype)

    out3 = pl.pallas_call(
        kernel,
        out_shape=jax.ShapeDtypeStruct((N, C, HW), x.dtype),
        grid_spec=pltpu.PrefetchScalarGridSpec(
            num_scalar_prefetch=0,
            grid=grid,
            in_specs=[
                # Batch dim squeezed out of the kernel view; (C, T) is lane-dense.
                pl.BlockSpec((None, C, T), lambda n, s: (n, 0, s)),
                # weight / bias stay resident across the whole grid.
                pl.BlockSpec((C, 1), lambda n, s: (0, 0)),
                pl.BlockSpec((C, 1), lambda n, s: (0, 0)),
            ],
            out_specs=pl.BlockSpec((None, C, T), lambda n, s: (n, 0, s)),
        ),
        compiler_params=pltpu.CompilerParams(
            dimension_semantics=("parallel", "parallel"),
            vmem_limit_bytes=vmem_limit,
        ),
    )(x3, w2, b2)

    return out3.reshape(N, C, H, W)


def _reference(x, weight, bias, eps=1e-6):
    u = jnp.mean(x, axis=1, keepdims=True)
    s = jnp.mean((x - u) ** 2, axis=1, keepdims=True)
    xn = (x - u) / jnp.sqrt(s + eps)
    return weight[None, :, None, None] * xn + bias[None, :, None, None]


if __name__ == "__main__":
    key = jax.random.PRNGKey(0)
    N, C, H, W = 2, 4, 16, 16
    x = jax.random.normal(key, (N, C, H, W), dtype=jnp.float32)

    # Parameters per nn.Module __init__ (normalized_shape = C), deterministic
    # non-trivial values to exercise the affine transform.
    weight = 1.0 + 0.1 * jnp.arange(C, dtype=jnp.float32)
    bias = 0.01 * jnp.arange(C, dtype=jnp.float32)

    out = layer_norm_channels_first(x, weight, bias, eps=1e-6)
    out = jax.block_until_ready(out)

    ref = _reference(x, weight, bias, eps=1e-6)
    assert out.shape == (N, C, H, W)
    assert jnp.allclose(out, ref, atol=1e-5, rtol=1e-5), "mismatch vs reference"

    print("KERNEL_OK")
</pallas_src>

<mosaic_0001>
module attributes {stable_mosaic.version = 11 : i64} {
  func.func @_ln_cfirst_kernel(%arg0: i32, %arg1: i32, %arg2: memref<1x4x128xf32, #tpu.memory_space<vmem>>, %arg3: memref<4x1xf32, #tpu.memory_space<vmem>>, %arg4: memref<4x1xf32, #tpu.memory_space<vmem>>, %arg5: memref<1x4x128xf32, #tpu.memory_space<vmem>>) attributes {dimension_semantics = [#tpu.dimension_semantics<parallel>, #tpu.dimension_semantics<parallel>], iteration_bounds = array<i64: 2, 2>, scalar_prefetch = 0 : i64, scratch_operands = 0 : i64, tpu.core_type = #tpu.core_type<tc>, window_params = [{transform_indices = @transform_0, window_bounds = array<i64: 1, 4, 128>}, {pipeline_mode = #tpu.pipeline_mode<synchronous>, transform_indices = @transform_1, window_bounds = array<i64: 4, 1>}, {pipeline_mode = #tpu.pipeline_mode<synchronous>, transform_indices = @transform_2, window_bounds = array<i64: 4, 1>}, {transform_indices = @transform_3, window_bounds = array<i64: 1, 4, 128>}]} {
    %c0 = arith.constant 0 : index
    %c0_0 = arith.constant 0 : index
    %c0_1 = arith.constant 0 : index
    %0 = vector.load %arg2[%c0, %c0_0, %c0_1] : memref<1x4x128xf32, #tpu.memory_space<vmem>>, vector<1x4x128xf32>
    %1 = vector.shape_cast %0 : vector<1x4x128xf32> to vector<4x128xf32>
    %cst = arith.constant dense<0.000000e+00> : vector<128xf32>
    %2 = vector.multi_reduction <add>, %1, %cst [0] : vector<4x128xf32> to vector<128xf32>
    %3 = vector.shape_cast %2 : vector<128xf32> to vector<1x128xf32>
    %cst_2 = arith.constant 2.500000e-01 : f32
    %4 = vector.broadcast %cst_2 : f32 to vector<1x128xf32>
    %5 = arith.mulf %3, %4 : vector<1x128xf32>
    %6 = vector.broadcast %5 : vector<1x128xf32> to vector<4x128xf32>
    %7 = arith.subf %1, %6 : vector<4x128xf32>
    %8 = arith.mulf %7, %7 : vector<4x128xf32>
    %cst_3 = arith.constant dense<0.000000e+00> : vector<128xf32>
    %9 = vector.multi_reduction <add>, %8, %cst_3 [0] : vector<4x128xf32> to vector<128xf32>
    %10 = vector.shape_cast %9 : vector<128xf32> to vector<1x128xf32>
    %cst_4 = arith.constant 2.500000e-01 : f32
    %11 = vector.broadcast %cst_4 : f32 to vector<1x128xf32>
    %12 = arith.mulf %10, %11 : vector<1x128xf32>
    %cst_5 = arith.constant 9.99999997E-7 : f32
    %13 = vector.broadcast %cst_5 : f32 to vector<1x128xf32>
    %14 = arith.addf %12, %13 : vector<1x128xf32>
    %15 = math.rsqrt %14 : vector<1x128xf32>
    %c0_6 = arith.constant 0 : index
    %c0_7 = arith.constant 0 : index
    %16 = vector.load %arg3[%c0_6, %c0_7] : memref<4x1xf32, #tpu.memory_space<vmem>>, vector<4x1xf32>
    %c0_8 = arith.constant 0 : index
    %c0_9 = arith.constant 0 : index
    %17 = vector.load %arg4[%c0_8, %c0_9] : memref<4x1xf32, #tpu.memory_space<vmem>>, vector<4x1xf32>
    %18 = vector.broadcast %15 : vector<1x128xf32> to vector<4x128xf32>
    %19 = arith.mulf %7, %18 : vector<4x128xf32>
    %20 = vector.broadcast %16 : vector<4x1xf32> to vector<4x128xf32>
    %21 = arith.mulf %20, %19 : vector<4x128xf32>
    %22 = vector.broadcast %17 : vector<4x1xf32> to vector<4x128xf32>
    %23 = arith.addf %21, %22 : vector<4x128xf32>
    %c0_10 = arith.constant 0 : index
    %c0_11 = arith.constant 0 : index
    %c0_12 = arith.constant 0 : index
    %24 = vector.load %arg5[%c0_10, %c0_11, %c0_12] : memref<1x4x128xf32, #tpu.memory_space<vmem>>, vector<1x4x128xf32>
    %25 = vector.shape_cast %24 : vector<1x4x128xf32> to vector<4x128xf32>
    %26 = vector.shape_cast %23 : vector<4x128xf32> to vector<1x4x128xf32>
    tpu.vector_store %arg5[%c0_10, %c0_11, %c0_12], %26 {strides = array<i32>} : memref<1x4x128xf32, #tpu.memory_space<vmem>>, vector<1x4x128xf32>,
    return
  }
  func.func @transform_0(%arg0: i32, %arg1: i32) -> (i32, i32, i32) {
    %c0_i32 = arith.constant 0 : i32
    %c0_i32_0 = arith.constant 0 : i32
    return %arg0, %c0_i32, %arg1 : i32, i32, i32
  }
  func.func @transform_1(%arg0: i32, %arg1: i32) -> (i32, i32) {
    %c0_i32 = arith.constant 0 : i32
    %c0_i32_0 = arith.constant 0 : i32
    %c0_i32_1 = arith.constant 0 : i32
    return %c0_i32, %c0_i32_0 : i32, i32
  }
  func.func @transform_2(%arg0: i32, %arg1: i32) -> (i32, i32) {
    %c0_i32 = arith.constant 0 : i32
    %c0_i32_0 = arith.constant 0 : i32
    %c0_i32_1 = arith.constant 0 : i32
    return %c0_i32, %c0_i32_0 : i32, i32
  }
  func.func @transform_3(%arg0: i32, %arg1: i32) -> (i32, i32, i32) {
    %c0_i32 = arith.constant 0 : i32
    %c0_i32_0 = arith.constant 0 : i32
    return %arg0, %c0_i32, %arg1 : i32, i32, i32
  }
}

</mosaic_0001>

<llo_original>
// kernel: tpu_custom_call.1
$region0: #{tpu_custom_call.1}
  #allocation0 [shape = 'u32[]', space=smem, size = 0x4, offset = 0x4, fixed_abs, tag = 'smem constant byte address 0x4 - core index']
  #allocation1 [shape = 'u32[144,128]{1,0:T(1,128)}', space=vmem, size = 0x12000, scoped, tag = 'internal scratch']
  %s0 = inlined_call_operand.hbm [shape: f32[2,4,256], index: 0, kind: input, shape index: {}]
  %s1 = inlined_call_operand.hbm [shape: f32[4,1], index: 1, kind: input, shape index: {}]
  %s2 = inlined_call_operand.hbm [shape: f32[4,1], index: 2, kind: input, shape index: {}]
  %s3 = inlined_call_operand.hbm [shape: f32[2,4,256], index: 3, kind: output, shape index: {}]
  %s4 = sld [smem:[#allocation0]]
  $region57: #{tpu_custom_call.1} parent=0
    _
  %s6 = ssub.s32 1, %s4
  %s7 = scalar_select 0, %s6, %s4
  $region1: #{tpu_custom_call.1} parent=0
    #allocation2 [shape = 'u8[4096]{0}', space=vmem, size = 0x1000, scoped, tag = 'input window, operand 0']
    #allocation3 [shape = 's32[2]{0}', space=sflag, size = 0x8, scoped, tag = 'scoped memory for tpu_custom_call.1']
    #allocation4 [shape = 's32[2]{0}', space=sflag, size = 0x8, scoped, tag = 'scoped memory for tpu_custom_call.1']
    #allocation5 [shape = 'u8[2048]{0}', space=vmem, size = 0x800, scoped, tag = 'input window, operand 1, single buffered']
    #allocation6 [shape = 's32[1]{0}', space=sflag, size = 0x4, scoped, tag = 'scoped memory for tpu_custom_call.1']
    #allocation7 [shape = 'u8[2048]{0}', space=vmem, size = 0x800, scoped, tag = 'input window, operand 2, single buffered']
    #allocation8 [shape = 'u8[4096]{0}', space=vmem, size = 0x1000, scoped, tag = 'output window, operand 0']
    %8 = vsyncpa [#allocation3], 0
    %s9 = scalar_lea.sflag [#allocation3], 1
    %10 = vsyncpa %s9, 0
    %11 = vsyncpa [#allocation6], 0
    %12 = vsyncpa [#allocation4], 0
    %s13 = scalar_lea.sflag [#allocation4], 1
    %14 = vsyncpa %s13, 0
    loop: start=0, step=1, limit=6
    $region2: #{tpu_custom_call.1} parent=1 // loop_pre_header
      _
    $region3: #{tpu_custom_call.1} parent=1 // loop_header
      %s16 = sphi 0, %s20
      %p17 = scmp.ge.s32.totalorder %s16, 6
      %s23 = sphi 0, %s35
      %s24 = sphi 0, %s31
      %s25 = sphi 0, %s23
      %s26 = sphi 0, %s24
      %s27 = sphi 0, %s25
      %s28 = sphi 0, %s26
      %s40 = sphi 0, %s42
      %s43 = sphi 0, %s40
      %s44 = sphi 0, %s43
      %s60 = sphi 0, %s44
      %s64 = sphi 0, %s64
      %s66 = sphi 0, %s64
      %s67 = sphi 0, %s66
      %s81 = sphi 0, %s67
      %s85 = sphi 0, %s85
      %s87 = sphi 0, %s85
      %s88 = sphi 0, %s87
      %s102 = sphi 0, %s88
      %s110 = sphi 0, %s112
      %s113 = sphi 0, %s110
      %s114 = sphi 0, %s113
      %s130 = sphi 0, %s114
    $region4: #{tpu_custom_call.1} parent=1 // loop_header_branch
      %19 = sbr.rel (%p17) target = $region8
    $region5: #{tpu_custom_call.1} parent=1 // loop_body
      %s21 = ssub.s32 %s16, 1
      %s22 = ssub.s32 %s16, 2
      %s29 = sadd.s32 1, %s24
      %p30 = scmp.ge.s32.totalorder %s29, 2
      %s31 = scalar_select %p30, 0, %s29
      %s32 = sadd.s32 1, %s23
      %s33 = scalar_select %p30, %s32, %s23
      %p34 = scmp.ge.s32.totalorder %s33, 2
      %s35 = scalar_select %p34, 0, %s33
      %s36 = ssub.s32 %s23, %s35
      %s37 = ssub.s32 %s24, %s31
      %s38 = sor.u32 %s36, %s37
      %p39 = scmp.eq.s32.totalorder %s38, 0
      %s41 = sadd.s32 %s40, 1
      %s42 = scalar_select %p39, %s40, %s41
      %p45 = pneg %p39
      %p46 = scmp.eq.s32.totalorder %s16, 3
      %p47 = por %p45, %p46
      %p48 = scmp.ne.s32.totalorder %s40, %s43
      %p49 = scmp.eq.s32.totalorder %s16, 0
      %p50 = por %p48, %p49
      %p51 = scmp.ne.s32.totalorder %s40, %s43
      %p52 = scmp.eq.s32.totalorder %s21, 3
      %p53 = por %p51, %p52
      %p54 = scmp.ne.s32.totalorder %s43, %s44
      %p55 = scmp.eq.s32.totalorder %s21, 0
      %p56 = por %p54, %p55
      %p57 = scmp.ne.s32.totalorder %s43, %s44
      %p58 = scmp.eq.s32.totalorder %s22, 3
      %p59 = por %p57, %p58
      %p61 = scmp.ne.s32.totalorder %s44, %s60
      %p62 = scmp.eq.s32.totalorder %s22, 0
      %p63 = por %p61, %p62
      %s65 = sadd.s32 %s64, 1
      %p68 = scmp.eq.s32.totalorder %s16, 3
      %p69 = scmp.ne.s32.totalorder %s64, %s66
      %p70 = scmp.eq.s32.totalorder %s16, 0
      %p71 = por %p69, %p70
      %p72 = scmp.ne.s32.totalorder %s64, %s66
      %p73 = scmp.eq.s32.totalorder %s21, 3
      %p74 = por %p72, %p73
      %p75 = scmp.ne.s32.totalorder %s66, %s67
      %p76 = scmp.eq.s32.totalorder %s21, 0
      %p77 = por %p75, %p76
      %p78 = scmp.ne.s32.totalorder %s66, %s67
      %p79 = scmp.eq.s32.totalorder %s22, 3
      %p80 = por %p78, %p79
      %p82 = scmp.ne.s32.totalorder %s67, %s81
      %p83 = scmp.eq.s32.totalorder %s22, 0
      %p84 = por %p82, %p83
      %s86 = sadd.s32 %s85, 1
      %p89 = scmp.eq.s32.totalorder %s16, 3
      %p90 = scmp.ne.s32.totalorder %s85, %s87
      %p91 = scmp.eq.s32.totalorder %s16, 0
      %p92 = por %p90, %p91
      %p93 = scmp.ne.s32.totalorder %s85, %s87
      %p94 = scmp.eq.s32.totalorder %s21, 3
      %p95 = por %p93, %p94
      %p96 = scmp.ne.s32.totalorder %s87, %s88
      %p97 = scmp.eq.s32.totalorder %s21, 0
      %p98 = por %p96, %p97
      %p99 = scmp.ne.s32.totalorder %s87, %s88
      %p100 = scmp.eq.s32.totalorder %s22, 3
      %p101 = por %p99, %p100
      %p103 = scmp.ne.s32.totalorder %s88, %s102
      %p104 = scmp.eq.s32.totalorder %s22, 0
      %p105 = por %p103, %p104
      %s106 = ssub.s32 %s23, %s35
      %s107 = ssub.s32 %s24, %s31
      %s108 = sor.u32 %s106, %s107
      %p109 = scmp.eq.s32.totalorder %s108, 0
      %s111 = sadd.s32 %s110, 1
      %s112 = scalar_select %p109, %s110, %s111
      %p115 = pneg %p109
      %p116 = scmp.eq.s32.totalorder %s16, 3
      %p117 = por %p115, %p116
      %p118 = scmp.ne.s32.totalorder %s110, %s113
      %p119 = scmp.eq.s32.totalorder %s16, 0
      %p120 = por %p118, %p119
      %p121 = scmp.ne.s32.totalorder %s110, %s113
      %p122 = scmp.eq.s32.totalorder %s21, 3
      %p123 = por %p121, %p122
      %p124 = scmp.ne.s32.totalorder %s113, %s114
      %p125 = scmp.eq.s32.totalorder %s21, 0
      %p126 = por %p124, %p125
      %p127 = scmp.ne.s32.totalorder %s113, %s114
      %p128 = scmp.eq.s32.totalorder %s22, 3
      %p129 = por %p127, %p128
      %p131 = scmp.ne.s32.totalorder %s114, %s130
      %p132 = scmp.eq.s32.totalorder %s22, 0
      %p133 = por %p131, %p132
      %p134 = scmp.le.s32.totalorder 1, %s16
      %p135 = scmp.lt.s32.totalorder %s16, 5
      %p136 = pnand %p134, %p135
      %p137 = pneg %p136
      // Predicated region
      $region9: #{tpu_custom_call.1} parent=5 // pred_check
        _
      $region10: #{tpu_custom_call.1} parent=5 // pred_check_branch
        %139 = sbr.rel (%p136) target = $region12
      $region11: #{tpu_custom_call.1} parent=5 // pred_region
        %s140 = ssub.s32 %s16, 1
        // Predicated region
        $region13: #{tpu_custom_call.1} parent=11 // pred_check
          %p141 = pneg %p77
        $region14: #{tpu_custom_call.1} parent=11 // pred_check_branch
          %143 = sbr.rel (%p141) target = $region16
        $region15: #{tpu_custom_call.1} parent=11 // pred_region
          %s145 = ssub.s32 64, 64
          %146 = vsyncadd [#allocation6], %s145
          %s148 = sshll.u32 [#allocation5], 4
          %s149 = int_to_ptr.vmem [resolvable:$true] %s148
          %151 = dma.hbm_to_vmem [thread:$0]  %s1, 64, %s149, [#allocation6]
        $region16: #{tpu_custom_call.1} parent=11 // pred_fallthru
          _
        // Predicated region
        $region17: #{tpu_custom_call.1} parent=11 // pred_check
          %p152 = pneg %p98
        $region18: #{tpu_custom_call.1} parent=11 // pred_check_branch
          %154 = sbr.rel (%p152) target = $region20
        $region19: #{tpu_custom_call.1} parent=11 // pred_region
          %s156 = ssub.s32 64, 64
          %157 = vsyncadd [#allocation6], %s156
          %s159 = sshll.u32 [#allocation7], 4
          %s160 = int_to_ptr.vmem [resolvable:$true] %s159
          %162 = dma.hbm_to_vmem [thread:$0]  %s2, 64, %s160, [#allocation6]
        $region20: #{tpu_custom_call.1} parent=11 // pred_fallthru
          _
      $region12: #{tpu_custom_call.1} parent=5 // pred_fallthru
        _
      %p163 = scmp.lt.s32.totalorder %s16, 4
      // Predicated region
      $region21: #{tpu_custom_call.1} parent=5 // pred_check
        %p164 = pneg %p163
      $region22: #{tpu_custom_call.1} parent=5 // pred_check_branch
        %166 = sbr.rel (%p164) target = $region24
      $region23: #{tpu_custom_call.1} parent=5 // pred_region
        // Predicated region
        $region25: #{tpu_custom_call.1} parent=23 // pred_check
          %p167 = pneg %p50
        $region26: #{tpu_custom_call.1} parent=23 // pred_check_branch
          %169 = sbr.rel (%p167) target = $region28
        $region27: #{tpu_custom_call.1} parent=23 // pred_region
          %s170 = sand.u32 %s40, 1
          %s171 = scalar_lea.sflag [#allocation3], %s170
          %s172 = sand.u32 %s40, 1
          %s173 = smul.addr %s172, 4
          %s174 = scalar_lea.vmem [#allocation2], %s173
          %s176 = ssub.s32 64, 64
          %177 = vsyncadd %s171, %s176
          %s178 = smul.addr %s23, 2
          %s179 = sadd.s32 %s24, %s178
          %s180 = smul.addr %s179, 64
          %s181 = scalar_lea.hbm %s0, %s180
          %s183 = sshll.u32 %s174, 4
          %s184 = int_to_ptr.vmem [resolvable:$true] %s183
          %186 = dma.hbm_to_vmem [thread:$0]  %s181, 64, %s184, %s171
        $region28: #{tpu_custom_call.1} parent=23 // pred_fallthru
          _
      $region24: #{tpu_custom_call.1} parent=5 // pred_fallthru
        _
      %p187 = scmp.le.s32.totalorder 1, %s16
      %p188 = scmp.lt.s32.totalorder %s16, 5
      %p189 = pnand %p187, %p188
      %p190 = pneg %p189
      // Predicated region
      $region29: #{tpu_custom_call.1} parent=5 // pred_check
        _
      $region30: #{tpu_custom_call.1} parent=5 // pred_check_branch
        %192 = sbr.rel (%p189) target = $region32
      $region31: #{tpu_custom_call.1} parent=5 // pred_region
        %s193 = ssub.s32 %s16, 1
        %s194 = sand.u32 %s43, 1
        %s195 = scalar_lea.sflag [#allocation3], %s194
        %s196 = sand.u32 %s43, 1
        %s197 = smul.addr %s196, 4
        %s198 = scalar_lea.vmem [#allocation2], %s197
        // Predicated region
        $region33: #{tpu_custom_call.1} parent=31 // pred_check
          %p199 = pneg %p56
        $region34: #{tpu_custom_call.1} parent=31 // pred_check_branch
          %201 = sbr.rel (%p199) target = $region36
        $region35: #{tpu_custom_call.1} parent=31 // pred_region
          %202 = dma.done %s195, 64
        $region36: #{tpu_custom_call.1} parent=31 // pred_fallthru
          _
        // Predicated region
        $region37: #{tpu_custom_call.1} parent=31 // pred_check
          %p203 = pneg %p77
        $region38: #{tpu_custom_call.1} parent=31 // pred_check_branch
          %205 = sbr.rel (%p203) target = $region40
        $region39: #{tpu_custom_call.1} parent=31 // pred_region
          %206 = dma.done [#allocation6], 64
        $region40: #{tpu_custom_call.1} parent=31 // pred_fallthru
          _
        // Predicated region
        $region41: #{tpu_custom_call.1} parent=31 // pred_check
          %p207 = pneg %p98
        $region42: #{tpu_custom_call.1} parent=31 // pred_check_branch
          %209 = sbr.rel (%p207) target = $region44
        $region43: #{tpu_custom_call.1} parent=31 // pred_region
          %210 = dma.done [#allocation6], 64
        $region44: #{tpu_custom_call.1} parent=31 // pred_fallthru
          _
        %s211 = sand.u32 %s43, 1
        %s212 = scalar_lea.sflag [#allocation3], %s211
        %s213 = sand.u32 %s43, 1
        %s214 = smul.addr %s213, 4
        %s215 = scalar_lea.vmem [#allocation2], %s214
        %p216 = pneg %p56
        %p217 = pneg %p53
        %p218 = pneg %p77
        %p219 = pneg %p74
        %p220 = pneg %p98
        %p221 = pneg %p95
        %p222 = pneg %p126
        %p223 = pneg %p123
        %s224 = sand.u32 %s113, 1
        %s225 = scalar_lea.sflag [#allocation4], %s224
        %s226 = sand.u32 %s113, 1
        %s227 = smul.addr %s226, 4
        %s228 = scalar_lea.vmem [#allocation8], %s227
        %v229 = vld [vmem:[%s198] sm:$0xf]
        %vm230 = vcmask 1043456
        %v231 = vsel %vm230, %v229, 0.0
        %v232 = vrot.slane %v231, 4
        %v233 = vadd.f32 %v231, %v232
        %v234 = vrot.slane %v233, 2
        %v235 = vadd.f32 %v233, %v234
        %v236 = vrot.slane %v235, 1
        %v237 = vadd.f32 %v235, %v236
        %v238 = vmul.f32 %v237, 0.25
        %v239 = vsub.f32 %v229, %v238
        %v240 = vmul.f32 %v239, %v239
        %v241 = vsel %vm230, %v240, 0.0
        %v242 = vrot.slane %v241, 4
        %v243 = vadd.f32 %v241, %v242
        %v244 = vrot.slane %v243, 2
        %v245 = vadd.f32 %v243, %v244
        %v246 = vrot.slane %v245, 1
        %v247 = vadd.f32 %v245, %v246
        %v248 = vmul.f32 %v247, 0.25
        %v249 = vadd.f32 %v248, 1e-06
        %v250 = vrsqrt.pop %v249
        %v251 = vld [vmem:[#allocation5] sm:$0xf]
        %v252 = vld [vmem:[#allocation7] sm:$0xf]
        %v253 = vmul.f32 %v239, %v250
        %255 = vset.pattern.permute.xlu0 0
        %256 = vperm.xlu0 %255, %v251
        %v257 = vpop.permute.xlu0 %256
        %v259 = vmul.f32 %v257, %v253
        %261 = vset.pattern.permute.xlu0 0
        %262 = vperm.xlu0 %261, %v252
        %v263 = vpop.permute.xlu0 %262
        %v265 = vadd.f32 %v259, %v263
        %266 = vst [vmem:[%s228] sm:$0xf] %v265
        %s267 = sand.u32 %s113, 1
        %s268 = scalar_lea.sflag [#allocation4], %s267
        %s269 = sand.u32 %s113, 1
        %s270 = smul.addr %s269, 4
        %s271 = scalar_lea.vmem [#allocation8], %s270
        // Predicated region
        $region45: #{tpu_custom_call.1} parent=31 // pred_check
          %p272 = pneg %p123
        $region46: #{tpu_custom_call.1} parent=31 // pred_check_branch
          %274 = sbr.rel (%p272) target = $region48
        $region47: #{tpu_custom_call.1} parent=31 // pred_region
          %s276 = ssub.s32 64, 64
          %277 = vsyncadd %s268, %s276
          %s278 = smul.addr %s25, 2
          %s279 = sadd.s32 %s26, %s278
          %s280 = smul.addr %s279, 64
          %s281 = scalar_lea.hbm %s3, %s280
          %s283 = sshll.u32 %s271, 4
          %s284 = int_to_ptr.vmem [resolvable:$true] %s283
          %286 = dma.vmem_to_hbm [thread:$0]  %s284, 64, %s281, %s268
        $region48: #{tpu_custom_call.1} parent=31 // pred_fallthru
          _
      $region32: #{tpu_custom_call.1} parent=5 // pred_fallthru
        _
      %p287 = scmp.le.s32.totalorder 2, %s16
      // Predicated region
      $region49: #{tpu_custom_call.1} parent=5 // pred_check
        %p288 = pneg %p287
      $region50: #{tpu_custom_call.1} parent=5 // pred_check_branch
        %290 = sbr.rel (%p288) target = $region52
      $region51: #{tpu_custom_call.1} parent=5 // pred_region
        %s291 = ssub.s32 %s16, 2
        // Predicated region
        $region53: #{tpu_custom_call.1} parent=51 // pred_check
          %p292 = pneg %p129
        $region54: #{tpu_custom_call.1} parent=51 // pred_check_branch
          %294 = sbr.rel (%p292) target = $region56
        $region55: #{tpu_custom_call.1} parent=51 // pred_region
          %s295 = sand.u32 %s114, 1
          %s296 = scalar_lea.sflag [#allocation4], %s295
          %s297 = sand.u32 %s114, 1
          %s298 = smul.addr %s297, 4
          %s299 = scalar_lea.vmem [#allocation8], %s298
          %300 = dma.done %s296, 64
        $region56: #{tpu_custom_call.1} parent=51 // pred_fallthru
          _
      $region52: #{tpu_custom_call.1} parent=5 // pred_fallthru
        _
    $region6: #{tpu_custom_call.1} parent=1 // loop_footer
      %s20 = sadd.s32 1, %s16
    $region7: #{tpu_custom_call.1} parent=1 // loop_footer_branch
      %15 = sbr.rel target = $region3
    $region8: #{tpu_custom_call.1} parent=1 // loop_exit
      _
    %301 = vsyncpa [#allocation3], 1
    %s302 = scalar_lea.sflag [#allocation3], 1
    %303 = vsyncpa %s302, 1
    %304 = vsyncpa [#allocation6], 1
    %305 = vsyncpa [#allocation4], 1
    %s306 = scalar_lea.sflag [#allocation4], 1
    %307 = vsyncpa %s306, 1

</llo_original>
